<compile_context>
chip_gen: v7x
topology: tpu7x:2x2x1
jax: 0.10.0
libtpu: 0.0.40
codegen_flags: <defaults>
</compile_context>

<pallas_src>
import numpy as np
import jax
import jax.numpy as jnp
from jax import lax
from jax.experimental import pallas as pl
from jax.experimental.pallas import tpu as pltpu

# ---- the PyTorch module's (undefined-in-file) hyperparameters ----
conv_layers = 2
first_layer_channels = 4
kernel_size = 3
stride = 1
padding = 1
fc_layers = 3
n_outputs = 8
LEAKY_SLOPE = 0.01   # nn.LeakyReLU default negative_slope
BN_EPS = 1e-5        # nn.BatchNorm1d default eps

MAX_ROW_TILE = 512   # batch rows per grid step; f32 + double-buffering << 64 MiB (v7x VMEM)


# ----------------------------- Pallas kernel ------------------------------
def _make_fused_kernel(n_conv, n_fc):
    """One fused kernel: [conv+BN -> tanh] * n_conv  ->  [fc (-> leakyrelu)] * n_fc.

    Each conv layer arrives as a pre-folded lane-dense matrix + shift row, so
    every layer is: MXU matmul (f32 accumulate) + broadcast add + activation.
    """
    def kernel(*refs):
        x_ref, o_ref = refs[0], refs[-1]
        h = x_ref[...]
        idx = 1
        for _ in range(n_conv):
            a_ref, t_ref = refs[idx], refs[idx + 1]
            idx += 2
            h = jnp.dot(h, a_ref[...], preferred_element_type=jnp.float32) + t_ref[...]
            h = jnp.tanh(h)                                   # EUP slot
        for j in range(n_fc):
            w_ref, b_ref = refs[idx], refs[idx + 1]
            idx += 2
            h = jnp.dot(h, w_ref[...], preferred_element_type=jnp.float32) + b_ref[...]
            if j < n_fc - 1:
                h = jnp.where(h > 0, h, LEAKY_SLOPE * h)      # VPU
        o_ref[...] = h.astype(o_ref.dtype)
    return kernel


# ------------------------ host-side parameter folding ---------------------
def _conv_bn_to_matrix(W, b, gamma, beta, rm, rv, L_in):
    """Fold Conv1d(stride/padding) + eval-mode BatchNorm1d into one matmul.

    Returns A: (Cin*L_in, Cout*L_out) with BN scale folded into its columns,
    t: (1, Cout*L_out) row shift (conv bias + BN shift), and L_out.
    Column order co*L_out + l matches torch.flatten(start_dim=1).
    """
    Wn = np.asarray(W, np.float32)
    Cout, Cin, K = Wn.shape
    L_out = (L_in + 2 * padding - K) // stride + 1
    scale = np.asarray(gamma, np.float32) / np.sqrt(np.asarray(rv, np.float32) + BN_EPS)
    shift = (np.asarray(b, np.float32) - np.asarray(rm, np.float32)) * scale + np.asarray(beta, np.float32)
    A = np.zeros((Cin, L_in, Cout, L_out), np.float32)
    for k in range(K):
        for l in range(L_out):
            j = l * stride + k - padding          # input position feeding output l via tap k
            if 0 <= j < L_in:
                A[:, j, :, l] += Wn[:, :, k].T    # (Cin, Cout)
    A = A.reshape(Cin * L_in, Cout * L_out)
    A = A * np.repeat(scale, L_out)[None, :]      # BN scale folded into weight columns
    t = np.repeat(shift, L_out)[None, :].astype(np.float32)
    return jnp.asarray(A), jnp.asarray(t), L_out


def fold_params(params, input_len):
    """Pre-fold all layers (done once, off the hot path) into (matrix, row) pairs."""
    ops = []
    L = input_len
    for i in range(conv_layers):
        W, b = params["convs"][i]
        gamma, beta, rm, rv = params["bns"][i]
        # TODO(synk): BatchNorm1d is folded with running statistics (eval mode);
        # train-mode per-batch statistics are not reproduced.
        A, t, L = _conv_bn_to_matrix(W, b, gamma, beta, rm, rv, L)
        ops.append((A, t))
    for (W, b) in params["fcs"]:
        ops.append((jnp.asarray(np.asarray(W, np.float32).T),
                    jnp.asarray(np.asarray(b, np.float32)[None, :])))
    return ops


# ------------------------------ forward (Pallas) --------------------------
def forward_pallas(ops, x):
    # x: (B, 1, L) float32 (NCL, as PyTorch Conv1d expects; Cin == 1)
    B = x.shape[0]
    L = x.shape[-1]
    x2 = x.reshape(B, L)                          # feature index ci*L + j with ci = 0

    TB = B if B <= MAX_ROW_TILE else MAX_ROW_TILE
    n_blk = -(-B // TB)
    Bp = n_blk * TB
    if Bp != B:
        x2 = jnp.pad(x2, ((0, Bp - B), (0, 0)))

    operands = [x2]
    in_specs = [pl.BlockSpec((TB, L), lambda i: (i, 0))]
    for (m, r) in ops:
        operands += [m, r]
        # weights/shift rows are resident in VMEM across all grid steps
        in_specs += [pl.BlockSpec(m.shape, lambda i: (0, 0)),
                     pl.BlockSpec(r.shape, lambda i: (0, 0))]

    kernel = _make_fused_kernel(conv_layers, fc_layers)
    out = pl.pallas_call(
        kernel,
        out_shape=jax.ShapeDtypeStruct((Bp, n_outputs), jnp.float32),
        grid_spec=pltpu.PrefetchScalarGridSpec(
            num_scalar_prefetch=0,
            grid=(n_blk,),
            in_specs=in_specs,
            out_specs=pl.BlockSpec((TB, n_outputs), lambda i: (i, 0)),
        ),
        compiler_params=pltpu.CompilerParams(dimension_semantics=("parallel",)),
    )(*operands)
    return out[:B] if Bp != B else out


# ------------------------------ init & reference --------------------------
def init_params(key, input_len):
    l = input_len
    ch = first_layer_channels
    keys = iter(jax.random.split(key, 32))
    params = {"convs": [], "bns": [], "fcs": []}
    c_in = 1
    for _ in range(conv_layers):
        bound = 1.0 / np.sqrt(c_in * kernel_size)
        W = jax.random.uniform(next(keys), (ch, c_in, kernel_size), jnp.float32, -bound, bound)
        b = jax.random.uniform(next(keys), (ch,), jnp.float32, -bound, bound)
        params["convs"].append((W, b))
        gamma = 1.0 + 0.1 * jax.random.normal(next(keys), (ch,), jnp.float32)
        beta = 0.1 * jax.random.normal(next(keys), (ch,), jnp.float32)
        rm = 0.05 * jax.random.normal(next(keys), (ch,), jnp.float32)
        rv = 1.0 + 0.1 * jax.random.uniform(next(keys), (ch,), jnp.float32)
        params["bns"].append((gamma, beta, rm, rv))
        c_in = ch
        l = int((l + 2 * padding - kernel_size) / stride + 1)
    flat_dim = l * ch
    powers = np.linspace(int(np.floor(np.log2(flat_dim - 1))),
                         int(np.ceil(np.log2(n_outputs + 1))), fc_layers - 1)
    values = [flat_dim] + [int(2 ** p) for p in powers] + [n_outputs]
    for i in range(fc_layers):
        bound = 1.0 / np.sqrt(values[i])
        W = jax.random.uniform(next(keys), (values[i + 1], values[i]), jnp.float32, -bound, bound)
        b = jax.random.uniform(next(keys), (values[i + 1],), jnp.float32, -bound, bound)
        params["fcs"].append((W, b))
    return params, values


def forward_ref(params, x):
    # pure-JAX reference of the same forward pass, for correctness checking
    h = x
    for i in range(conv_layers):
        W, b = params["convs"][i]
        gamma, beta, rm, rv = params["bns"][i]
        h = lax.conv_general_dilated(h, W, window_strides=(stride,),
                                     padding=((padding, padding),),
                                     dimension_numbers=("NCH", "OIH", "NCH"))
        h = h + b[None, :, None]
        h = (h - rm[None, :, None]) / jnp.sqrt(rv[None, :, None] + BN_EPS)
        h = gamma[None, :, None] * h + beta[None, :, None]
        h = jnp.tanh(h)
    flat = h.reshape(h.shape[0], -1)
    (W0, b0), (W1, b1), (W2, b2) = params["fcs"]
    h = flat @ W0.T + b0
    h = jnp.where(h > 0, h, LEAKY_SLOPE * h)
    h = h @ W1.T + b1
    h = jnp.where(h > 0, h, LEAKY_SLOPE * h)
    return h @ W2.T + b2


if __name__ == "__main__":
    B, input_len = 2, 32
    key = jax.random.PRNGKey(0)
    pkey, xkey = jax.random.split(key)
    params, values = init_params(pkey, input_len)   # values == [128, 64, 16, 8]
    x = jax.random.normal(xkey, (B, 1, input_len), jnp.float32)

    ops = fold_params(params, input_len)            # host-side, once, off the hot path
    fwd = jax.jit(forward_pallas)
    out = jax.block_until_ready(fwd(ops, x))
    ref = jax.block_until_ready(forward_ref(params, x))

    assert out.shape == (B, n_outputs), out.shape
    np.testing.assert_allclose(np.asarray(out), np.asarray(ref), rtol=1e-4, atol=1e-4)
    print("KERNEL_OK")
</pallas_src>

<mosaic_0001>
module attributes {stable_mosaic.version = 11 : i64} {
  func.func @kernel(%arg0: i32, %arg1: memref<2x32xf32, #tpu.memory_space<vmem>>, %arg2: memref<32x128xf32, #tpu.memory_space<vmem>>, %arg3: memref<1x128xf32, #tpu.memory_space<vmem>>, %arg4: memref<128x128xf32, #tpu.memory_space<vmem>>, %arg5: memref<1x128xf32, #tpu.memory_space<vmem>>, %arg6: memref<128x64xf32, #tpu.memory_space<vmem>>, %arg7: memref<1x64xf32, #tpu.memory_space<vmem>>, %arg8: memref<64x16xf32, #tpu.memory_space<vmem>>, %arg9: memref<1x16xf32, #tpu.memory_space<vmem>>, %arg10: memref<16x8xf32, #tpu.memory_space<vmem>>, %arg11: memref<1x8xf32, #tpu.memory_space<vmem>>, %arg12: memref<2x8xf32, #tpu.memory_space<vmem>>) attributes {dimension_semantics = [#tpu.dimension_semantics<parallel>], iteration_bounds = array<i64: 1>, scalar_prefetch = 0 : i64, scratch_operands = 0 : i64, tpu.core_type = #tpu.core_type<tc>, window_params = [{transform_indices = @transform_0, window_bounds = array<i64: 2, 32>}, {pipeline_mode = #tpu.pipeline_mode<synchronous>, transform_indices = @transform_1, window_bounds = array<i64: 32, 128>}, {pipeline_mode = #tpu.pipeline_mode<synchronous>, transform_indices = @transform_2, window_bounds = array<i64: 1, 128>}, {pipeline_mode = #tpu.pipeline_mode<synchronous>, transform_indices = @transform_3, window_bounds = array<i64: 128, 128>}, {pipeline_mode = #tpu.pipeline_mode<synchronous>, transform_indices = @transform_4, window_bounds = array<i64: 1, 128>}, {pipeline_mode = #tpu.pipeline_mode<synchronous>, transform_indices = @transform_5, window_bounds = array<i64: 128, 64>}, {pipeline_mode = #tpu.pipeline_mode<synchronous>, transform_indices = @transform_6, window_bounds = array<i64: 1, 64>}, {pipeline_mode = #tpu.pipeline_mode<synchronous>, transform_indices = @transform_7, window_bounds = array<i64: 64, 16>}, {pipeline_mode = #tpu.pipeline_mode<synchronous>, transform_indices = @transform_8, window_bounds = array<i64: 1, 16>}, {pipeline_mode = #tpu.pipeline_mode<synchronous>, transform_indices = @transform_9, window_bounds = array<i64: 16, 8>}, {pipeline_mode = #tpu.pipeline_mode<synchronous>, transform_indices = @transform_10, window_bounds = array<i64: 1, 8>}, {transform_indices = @transform_11, window_bounds = array<i64: 2, 8>}]} {
    %c0 = arith.constant 0 : index
    %c0_0 = arith.constant 0 : index
    %0 = vector.load %arg1[%c0, %c0_0] : memref<2x32xf32, #tpu.memory_space<vmem>>, vector<2x32xf32>
    %c0_1 = arith.constant 0 : index
    %c0_2 = arith.constant 0 : index
    %1 = vector.load %arg2[%c0_1, %c0_2] : memref<32x128xf32, #tpu.memory_space<vmem>>, vector<32x128xf32>
    %cst = arith.constant dense<0.000000e+00> : vector<2x128xf32>
    %2 = tpu.matmul %0, %1, %cst {dimension_numbers = #tpu.dot_dimension_numbers<[1], [0], [0], [1], [0, 0, 1, 1], [], []>} : vector<2x32xf32>, vector<32x128xf32>, vector<2x128xf32> -> vector<2x128xf32>
    %c0_3 = arith.constant 0 : index
    %c0_4 = arith.constant 0 : index
    %3 = vector.load %arg3[%c0_3, %c0_4] : memref<1x128xf32, #tpu.memory_space<vmem>>, vector<1x128xf32>
    %4 = vector.broadcast %3 : vector<1x128xf32> to vector<2x128xf32>
    %5 = arith.addf %2, %4 : vector<2x128xf32>
    %6 = math.tanh %5 : vector<2x128xf32>
    %c0_5 = arith.constant 0 : index
    %c0_6 = arith.constant 0 : index
    %7 = vector.load %arg4[%c0_5, %c0_6] : memref<128x128xf32, #tpu.memory_space<vmem>>, vector<128x128xf32>
    %cst_7 = arith.constant dense<0.000000e+00> : vector<2x128xf32>
    %8 = tpu.matmul %6, %7, %cst_7 {dimension_numbers = #tpu.dot_dimension_numbers<[1], [0], [0], [1], [0, 0, 1, 1], [], []>} : vector<2x128xf32>, vector<128x128xf32>, vector<2x128xf32> -> vector<2x128xf32>
    %c0_8 = arith.constant 0 : index
    %c0_9 = arith.constant 0 : index
    %9 = vector.load %arg5[%c0_8, %c0_9] : memref<1x128xf32, #tpu.memory_space<vmem>>, vector<1x128xf32>
    %10 = vector.broadcast %9 : vector<1x128xf32> to vector<2x128xf32>
    %11 = arith.addf %8, %10 : vector<2x128xf32>
    %12 = math.tanh %11 : vector<2x128xf32>
    %c0_10 = arith.constant 0 : index
    %c0_11 = arith.constant 0 : index
    %13 = vector.load %arg6[%c0_10, %c0_11] : memref<128x64xf32, #tpu.memory_space<vmem>>, vector<128x64xf32>
    %cst_12 = arith.constant dense<0.000000e+00> : vector<2x64xf32>
    %14 = tpu.matmul %12, %13, %cst_12 {dimension_numbers = #tpu.dot_dimension_numbers<[1], [0], [0], [1], [0, 0, 1, 1], [], []>} : vector<2x128xf32>, vector<128x64xf32>, vector<2x64xf32> -> vector<2x64xf32>
    %c0_13 = arith.constant 0 : index
    %c0_14 = arith.constant 0 : index
    %15 = vector.load %arg7[%c0_13, %c0_14] : memref<1x64xf32, #tpu.memory_space<vmem>>, vector<1x64xf32>
    %16 = vector.broadcast %15 : vector<1x64xf32> to vector<2x64xf32>
    %17 = arith.addf %14, %16 : vector<2x64xf32>
    %cst_15 = arith.constant 0.000000e+00 : f32
    %18 = vector.broadcast %cst_15 : f32 to vector<2x64xf32>
    %19 = arith.cmpf ogt, %17, %18 : vector<2x64xf32>
    %cst_16 = arith.constant 0.00999999977 : f32
    %20 = vector.broadcast %cst_16 : f32 to vector<2x64xf32>
    %21 = arith.mulf %20, %17 : vector<2x64xf32>
    %22 = arith.select %19, %17, %21 : vector<2x64xi1>, vector<2x64xf32>
    %c0_17 = arith.constant 0 : index
    %c0_18 = arith.constant 0 : index
    %23 = vector.load %arg8[%c0_17, %c0_18] : memref<64x16xf32, #tpu.memory_space<vmem>>, vector<64x16xf32>
    %cst_19 = arith.constant dense<0.000000e+00> : vector<2x16xf32>
    %24 = tpu.matmul %22, %23, %cst_19 {dimension_numbers = #tpu.dot_dimension_numbers<[1], [0], [0], [1], [0, 0, 1, 1], [], []>} : vector<2x64xf32>, vector<64x16xf32>, vector<2x16xf32> -> vector<2x16xf32>
    %c0_20 = arith.constant 0 : index
    %c0_21 = arith.constant 0 : index
    %25 = vector.load %arg9[%c0_20, %c0_21] : memref<1x16xf32, #tpu.memory_space<vmem>>, vector<1x16xf32>
    %26 = vector.broadcast %25 : vector<1x16xf32> to vector<2x16xf32>
    %27 = arith.addf %24, %26 : vector<2x16xf32>
    %cst_22 = arith.constant 0.000000e+00 : f32
    %28 = vector.broadcast %cst_22 : f32 to vector<2x16xf32>
    %29 = arith.cmpf ogt, %27, %28 : vector<2x16xf32>
    %cst_23 = arith.constant 0.00999999977 : f32
    %30 = vector.broadcast %cst_23 : f32 to vector<2x16xf32>
    %31 = arith.mulf %30, %27 : vector<2x16xf32>
    %32 = arith.select %29, %27, %31 : vector<2x16xi1>, vector<2x16xf32>
    %c0_24 = arith.constant 0 : index
    %c0_25 = arith.constant 0 : index
    %33 = vector.load %arg10[%c0_24, %c0_25] : memref<16x8xf32, #tpu.memory_space<vmem>>, vector<16x8xf32>
    %cst_26 = arith.constant dense<0.000000e+00> : vector<2x8xf32>
    %34 = tpu.matmul %32, %33, %cst_26 {dimension_numbers = #tpu.dot_dimension_numbers<[1], [0], [0], [1], [0, 0, 1, 1], [], []>} : vector<2x16xf32>, vector<16x8xf32>, vector<2x8xf32> -> vector<2x8xf32>
    %c0_27 = arith.constant 0 : index
    %c0_28 = arith.constant 0 : index
    %35 = vector.load %arg11[%c0_27, %c0_28] : memref<1x8xf32, #tpu.memory_space<vmem>>, vector<1x8xf32>
    %36 = vector.broadcast %35 : vector<1x8xf32> to vector<2x8xf32>
    %37 = arith.addf %34, %36 : vector<2x8xf32>
    %c0_29 = arith.constant 0 : index
    %c0_30 = arith.constant 0 : index
    %38 = vector.load %arg12[%c0_29, %c0_30] : memref<2x8xf32, #tpu.memory_space<vmem>>, vector<2x8xf32>
    tpu.vector_store %arg12[%c0_29, %c0_30], %37 {strides = array<i32>} : memref<2x8xf32, #tpu.memory_space<vmem>>, vector<2x8xf32>,
    return
  }
  func.func @transform_0(%arg0: i32) -> (i32, i32) {
    %c0_i32 = arith.constant 0 : i32
    %c0_i32_0 = arith.constant 0 : i32
    return %arg0, %c0_i32 : i32, i32
  }
  func.func @transform_1(%arg0: i32) -> (i32, i32) {
    %c0_i32 = arith.constant 0 : i32
    %c0_i32_0 = arith.constant 0 : i32
    %c0_i32_1 = arith.constant 0 : i32
    return %c0_i32, %c0_i32_0 : i32, i32
  }
  func.func @transform_2(%arg0: i32) -> (i32, i32) {
    %c0_i32 = arith.constant 0 : i32
    %c0_i32_0 = arith.constant 0 : i32
    %c0_i32_1 = arith.constant 0 : i32
    return %c0_i32, %c0_i32_0 : i32, i32
  }
  func.func @transform_3(%arg0: i32) -> (i32, i32) {
    %c0_i32 = arith.constant 0 : i32
    %c0_i32_0 = arith.constant 0 : i32
    %c0_i32_1 = arith.constant 0 : i32
    return %c0_i32, %c0_i32_0 : i32, i32
  }
  func.func @transform_4(%arg0: i32) -> (i32, i32) {
    %c0_i32 = arith.constant 0 : i32
    %c0_i32_0 = arith.constant 0 : i32
    %c0_i32_1 = arith.constant 0 : i32
    return %c0_i32, %c0_i32_0 : i32, i32
  }
  func.func @transform_5(%arg0: i32) -> (i32, i32) {
    %c0_i32 = arith.constant 0 : i32
    %c0_i32_0 = arith.constant 0 : i32
    %c0_i32_1 = arith.constant 0 : i32
    return %c0_i32, %c0_i32_0 : i32, i32
  }
  func.func @transform_6(%arg0: i32) -> (i32, i32) {
    %c0_i32 = arith.constant 0 : i32
    %c0_i32_0 = arith.constant 0 : i32
    %c0_i32_1 = arith.constant 0 : i32
    return %c0_i32, %c0_i32_0 : i32, i32
  }
  func.func @transform_7(%arg0: i32) -> (i32, i32) {
    %c0_i32 = arith.constant 0 : i32
    %c0_i32_0 = arith.constant 0 : i32
    %c0_i32_1 = arith.constant 0 : i32
    return %c0_i32, %c0_i32_0 : i32, i32
  }
  func.func @transform_8(%arg0: i32) -> (i32, i32) {
    %c0_i32 = arith.constant 0 : i32
    %c0_i32_0 = arith.constant 0 : i32
    %c0_i32_1 = arith.constant 0 : i32
    return %c0_i32, %c0_i32_0 : i32, i32
  }
  func.func @transform_9(%arg0: i32) -> (i32, i32) {
    %c0_i32 = arith.constant 0 : i32
    %c0_i32_0 = arith.constant 0 : i32
    %c0_i32_1 = arith.constant 0 : i32
    return %c0_i32, %c0_i32_0 : i32, i32
  }
  func.func @transform_10(%arg0: i32) -> (i32, i32) {
    %c0_i32 = arith.constant 0 : i32
    %c0_i32_0 = arith.constant 0 : i32
    %c0_i32_1 = arith.constant 0 : i32
    return %c0_i32, %c0_i32_0 : i32, i32
  }
  func.func @transform_11(%arg0: i32) -> (i32, i32) {
    %c0_i32 = arith.constant 0 : i32
    %c0_i32_0 = arith.constant 0 : i32
    return %arg0, %c0_i32 : i32, i32
  }
}

</mosaic_0001>

<llo_original>
// kernel: forward_pallas.1
$region0: #{forward_pallas.1}
  #allocation0 [shape = 'u32[]', space=smem, size = 0x4, offset = 0x4, fixed_abs, tag = 'smem constant byte address 0x4 - core index']
  #allocation1 [shape = 'u32[144,128]{1,0:T(1,128)}', space=vmem, size = 0x12000, scoped, tag = 'internal scratch']
  %s0 = inlined_call_operand.vmem [shape: f32[2,32], index: 0, kind: input, shape index: {}]
  %s1 = inlined_call_operand.vmem [shape: f32[32,128], index: 1, kind: input, shape index: {}]
  %s2 = inlined_call_operand.vmem [shape: f32[1,128], index: 2, kind: input, shape index: {}]
  %s3 = inlined_call_operand.vmem [shape: f32[128,128], index: 3, kind: input, shape index: {}]
  %s4 = inlined_call_operand.vmem [shape: f32[1,128], index: 4, kind: input, shape index: {}]
  %s5 = inlined_call_operand.vmem [shape: f32[128,64], index: 5, kind: input, shape index: {}]
  %s6 = inlined_call_operand.vmem [shape: f32[1,64], index: 6, kind: input, shape index: {}]
  %s7 = inlined_call_operand.vmem [shape: f32[64,16], index: 7, kind: input, shape index: {}]
  %s8 = inlined_call_operand.vmem [shape: f32[1,16], index: 8, kind: input, shape index: {}]
  %s9 = inlined_call_operand.vmem [shape: f32[16,8], index: 9, kind: input, shape index: {}]
  %s10 = inlined_call_operand.vmem [shape: f32[1,8], index: 10, kind: input, shape index: {}]
  %s11 = inlined_call_operand.hbm [shape: f32[2,8], index: 11, kind: output, shape index: {}]
  %s12 = sld [smem:[#allocation0]]
  $region54: #{forward_pallas.1} parent=0
    _
  %s14 = ssub.s32 1, %s12
  %s15 = scalar_select 0, %s14, %s12
  $region1: #{forward_pallas.1} parent=0
    #allocation2 [shape = 'u8[1024]{0}', space=vmem, size = 0x400, scoped, tag = 'output window, operand 0, single buffered']
    #allocation3 [shape = 's32[1]{0}', space=sflag, size = 0x4, scoped, tag = 'scoped memory for forward_pallas.1']
    %16 = vsyncpa [#allocation3], 0
    // Predicated region
    $region2: #{forward_pallas.1} parent=1 // pred_check
      _
    $region3: #{forward_pallas.1} parent=1 // pred_check_branch
      %18 = sbr.rel (0) target = $region5
    $region4: #{forward_pallas.1} parent=1 // pred_region
      _
    $region5: #{forward_pallas.1} parent=1 // pred_fallthru
      _
    // Predicated region
    $region6: #{forward_pallas.1} parent=1 // pred_check
      _
    $region7: #{forward_pallas.1} parent=1 // pred_check_branch
      %20 = sbr.rel (0) target = $region9
    $region8: #{forward_pallas.1} parent=1 // pred_region
      _
    $region9: #{forward_pallas.1} parent=1 // pred_fallthru
      _
    // Predicated region
    $region10: #{forward_pallas.1} parent=1 // pred_check
      _
    $region11: #{forward_pallas.1} parent=1 // pred_check_branch
      %22 = sbr.rel (0) target = $region13
    $region12: #{forward_pallas.1} parent=1 // pred_region
      _
    $region13: #{forward_pallas.1} parent=1 // pred_fallthru
      _
    // Predicated region
    $region14: #{forward_pallas.1} parent=1 // pred_check
      _
    $region15: #{forward_pallas.1} parent=1 // pred_check_branch
      %24 = sbr.rel (0) target = $region17
    $region16: #{forward_pallas.1} parent=1 // pred_region
      _
    $region17: #{forward_pallas.1} parent=1 // pred_fallthru
      _
    // Predicated region
    $region18: #{forward_pallas.1} parent=1 // pred_check
      _
    $region19: #{forward_pallas.1} parent=1 // pred_check_branch
      %26 = sbr.rel (0) target = $region21
    $region20: #{forward_pallas.1} parent=1 // pred_region
      _
    $region21: #{forward_pallas.1} parent=1 // pred_fallthru
      _
    // Predicated region
    $region22: #{forward_pallas.1} parent=1 // pred_check
      _
    $region23: #{forward_pallas.1} parent=1 // pred_check_branch
      %28 = sbr.rel (0) target = $region25
    $region24: #{forward_pallas.1} parent=1 // pred_region
      _
    $region25: #{forward_pallas.1} parent=1 // pred_fallthru
      _
    // Predicated region
    $region26: #{forward_pallas.1} parent=1 // pred_check
      _
    $region27: #{forward_pallas.1} parent=1 // pred_check_branch
      %30 = sbr.rel (0) target = $region29
    $region28: #{forward_pallas.1} parent=1 // pred_region
      _
    $region29: #{forward_pallas.1} parent=1 // pred_fallthru
      _
    // Predicated region
    $region30: #{forward_pallas.1} parent=1 // pred_check
      _
    $region31: #{forward_pallas.1} parent=1 // pred_check_branch
      %32 = sbr.rel (0) target = $region33
    $region32: #{forward_pallas.1} parent=1 // pred_region
      _
    $region33: #{forward_pallas.1} parent=1 // pred_fallthru
      _
    // Predicated region
    $region34: #{forward_pallas.1} parent=1 // pred_check
      _
    $region35: #{forward_pallas.1} parent=1 // pred_check_branch
      %34 = sbr.rel (0) target = $region37
    $region36: #{forward_pallas.1} parent=1 // pred_region
      _
    $region37: #{forward_pallas.1} parent=1 // pred_fallthru
      _
    // Predicated region
    $region38: #{forward_pallas.1} parent=1 // pred_check
      _
    $region39: #{forward_pallas.1} parent=1 // pred_check_branch
      %36 = sbr.rel (0) target = $region41
    $region40: #{forward_pallas.1} parent=1 // pred_region
      _
    $region41: #{forward_pallas.1} parent=1 // pred_fallthru
      _
    // Predicated region
    $region42: #{forward_pallas.1} parent=1 // pred_check
      _
    $region43: #{forward_pallas.1} parent=1 // pred_check_branch
      %38 = sbr.rel (0) target = $region45
    $region44: #{forward_pallas.1} parent=1 // pred_region
      _
    $region45: #{forward_pallas.1} parent=1 // pred_fallthru
      _
    %v39 = vld [vmem:[%s0] sm:$0x3]
    %v40 = vld [vmem:[%s1] sm:$0xff]
    %v41 = vld [vmem:[%s1 + $0x8] sm:$0xff]
    %v42 = vld [vmem:[%s1 + $0x10] sm:$0xff]
    %v43 = vld [vmem:[%s1 + $0x18] sm:$0xff]
    %v44 = vld [vmem:[%s2] sm:$0x1]
    %v46 = vlaneseq
    %v47 = vshrl.u32 %v46, 7
    %v48 = vsub.s32 0, %v47
    %v49 = vrot.slane %v44, %v48
    %vm51 = vcmask 261120
    %v53 = vsel %vm51, %v39, 0
    %55 = vmatprep.subr.mxu0 0.0
    %56 = vmatpush1.msra.mxu0 %v40
    %57 = vmatprep.subr.mxu0 0.0
    %58 = vmatpush1.msra.mxu0 %v41
    %59 = vmatprep.subr.mxu0 0.0
    %60 = vmatpush1.msra.mxu0 %v42
    %61 = vmatprep.subr.mxu0 0.0
    %62 = vmatpush1.msra.mxu0 %v43
    %63 = vmatprep.subr.mxu0 0.0
    %64 = vmatpush1.msra.mxu0 0.0
    %65 = vmatprep.subr.mxu0 0.0
    %66 = vmatpush1.msra.mxu0 0.0
    %67 = vmatprep.subr.mxu0 0.0
    %68 = vmatpush1.msra.mxu0 0.0
    %69 = vmatprep.subr.mxu0 0.0
    %70 = vmatpush1.msra.mxu0 0.0
    %71 = vmatprep.subr.mxu0 0.0
    %72 = vmatpush1.msra.mxu0 0.0
    %73 = vmatprep.subr.mxu0 0.0
    %74 = vmatpush1.msra.mxu0 0.0
    %75 = vmatprep.subr.mxu0 0.0
    %76 = vmatpush1.msra.mxu0 0.0
    %77 = vmatprep.subr.mxu0 0.0
    %78 = vmatpush1.msra.mxu0 0.0
    %79 = vmatprep.subr.mxu0 0.0
    %80 = vmatpush1.msra.mxu0 0.0
    %81 = vmatprep.subr.mxu0 0.0
    %82 = vmatpush1.msra.mxu0 0.0
    %83 = vmatprep.subr.mxu0 0.0
    %84 = vmatpush1.msra.mxu0 0.0
    %85 = vmatprep.subr.mxu0 0.0
    %86 = vmatpush1.msra.mxu0 0.0
    %87 = vmatprep.subr.mxu0 0.0
    %88 = vmatpush1.msra.mxu0 0.0
    %89 = vmatprep.subr.mxu0 0.0
    %90 = vmatpush1.msra.mxu0 0.0
    %91 = vmatprep.subr.mxu0 0.0
    %92 = vmatpush1.msra.mxu0 0.0
    %93 = vmatprep.subr.mxu0 0.0
    %94 = vmatpush1.msra.mxu0 0.0
    %95 = vmatprep.subr.mxu0 0.0
    %96 = vmatpush1.msra.mxu0 0.0
    %97 = vmatprep.subr.mxu0 0.0
    %98 = vmatpush1.msra.mxu0 0.0
    %99 = vmatprep.subr.mxu0 0.0
    %100 = vmatpush1.msra.mxu0 0.0
    %101 = vmatprep.subr.mxu0 0.0
    %102 = vmatpush1.msra.mxu0 0.0
    %103 = vmatprep.subr.mxu0 0.0
    %104 = vmatpush1.msra.mxu0 0.0
    %105 = vmatprep.subr.mxu0 0.0
    %106 = vmatpush1.msra.mxu0 0.0
    %107 = vmatprep.subr.mxu0 0.0
    %108 = vmatpush1.msra.mxu0 0.0
    %109 = vmatprep.subr.mxu0 0.0
    %110 = vmatpush1.msra.mxu0 0.0
    %111 = vmatprep.subr.mxu0 0.0
    %112 = vmatpush1.msra.mxu0 0.0
    %113 = vmatprep.subr.mxu0 0.0
    %114 = vmatpush1.msra.mxu0 0.0
    %115 = vmatprep.subr.mxu0 0.0
    %116 = vmatpush1.msra.mxu0 0.0
    %117 = vmatprep.subr.mxu0 0.0
    %118 = vmatpush1.msra.mxu0 0.0
    %119 = vmatprep.mubr.f32.mxu0 0.0
    %120 = vmatmul.mubr.f32.gmra.mrb[0].mxu0 %v53
    %v121 = vpop.f32.mrb[0].mxu0
    %v122 = vadd.f32 %v49, %v121
    %v123 = vpop.f32.mrb[0].mxu0
    %124 = vdwg.mxu0
    %v125 = vtanh.pop %v122
    %v126 = vld [vmem:[%s3] sm:$0xff]
    %v127 = vld [vmem:[%s3 + $0x8] sm:$0xff]
    %v128 = vld [vmem:[%s3 + $0x10] sm:$0xff]
    %v129 = vld [vmem:[%s3 + $0x18] sm:$0xff]
    %v130 = vld [vmem:[%s3 + $0x20] sm:$0xff]
    %v131 = vld [vmem:[%s3 + $0x28] sm:$0xff]
    %v132 = vld [vmem:[%s3 + $0x30] sm:$0xff]
    %v133 = vld [vmem:[%s3 + $0x38] sm:$0xff]
    %v134 = vld [vmem:[%s3 + $0x40] sm:$0xff]
    %v135 = vld [vmem:[%s3 + $0x48] sm:$0xff]
    %v136 = vld [vmem:[%s3 + $0x50] sm:$0xff]
    %v137 = vld [vmem:[%s3 + $0x58] sm:$0xff]
    %v138 = vld [vmem:[%s3 + $0x60] sm:$0xff]
    %v139 = vld [vmem:[%s3 + $0x68] sm:$0xff]
    %v140 = vld [vmem:[%s3 + $0x70] sm:$0xff]
    %v141 = vld [vmem:[%s3 + $0x78] sm:$0xff]
    %v142 = vld [vmem:[%s4] sm:$0x1]
    %v144 = vlaneseq
    %v145 = vshrl.u32 %v144, 7
    %v146 = vsub.s32 0, %v145
    %v147 = vrot.slane %v142, %v146
    %149 = vmatprep.subr.mxu0 0.0
    %150 = vmatpush1.msra.mxu0 %v126
    %151 = vmatprep.subr.mxu0 0.0
    %152 = vmatpush1.msra.mxu0 %v127
    %153 = vmatprep.subr.mxu0 0.0
    %154 = vmatpush1.msra.mxu0 %v128
    %155 = vmatprep.subr.mxu0 0.0
    %156 = vmatpush1.msra.mxu0 %v129
    %157 = vmatprep.subr.mxu0 0.0
    %158 = vmatpush1.msra.mxu0 %v130
    %159 = vmatprep.subr.mxu0 0.0
    %160 = vmatpush1.msra.mxu0 %v131
    %161 = vmatprep.subr.mxu0 0.0
    %162 = vmatpush1.msra.mxu0 %v132
    %163 = vmatprep.subr.mxu0 0.0
    %164 = vmatpush1.msra.mxu0 %v133
    %165 = vmatprep.subr.mxu0 0.0
    %166 = vmatpush1.msra.mxu0 %v134
    %167 = vmatprep.subr.mxu0 0.0
    %168 = vmatpush1.msra.mxu0 %v135
    %169 = vmatprep.subr.mxu0 0.0
    %170 = vmatpush1.msra.mxu0 %v136
    %171 = vmatprep.subr.mxu0 0.0
    %172 = vmatpush1.msra.mxu0 %v137
    %173 = vmatprep.subr.mxu0 0.0
    %174 = vmatpush1.msra.mxu0 %v138
    %175 = vmatprep.subr.mxu0 0.0
    %176 = vmatpush1.msra.mxu0 %v139
    %177 = vmatprep.subr.mxu0 0.0
    %178 = vmatpush1.msra.mxu0 %v140
    %179 = vmatprep.subr.mxu0 0.0
    %180 = vmatpush1.msra.mxu0 %v141
    %181 = vmatprep.subr.mxu0 0.0
    %182 = vmatpush1.msra.mxu0 0.0
    %183 = vmatprep.subr.mxu0 0.0
    %184 = vmatpush1.msra.mxu0 0.0
    %185 = vmatprep.subr.mxu0 0.0
    %186 = vmatpush1.msra.mxu0 0.0
    %187 = vmatprep.subr.mxu0 0.0
    %188 = vmatpush1.msra.mxu0 0.0
    %189 = vmatprep.subr.mxu0 0.0
    %190 = vmatpush1.msra.mxu0 0.0
    %191 = vmatprep.subr.mxu0 0.0
    %192 = vmatpush1.msra.mxu0 0.0
    %193 = vmatprep.subr.mxu0 0.0
    %194 = vmatpush1.msra.mxu0 0.0
    %195 = vmatprep.subr.mxu0 0.0
    %196 = vmatpush1.msra.mxu0 0.0
    %197 = vmatprep.subr.mxu0 0.0
    %198 = vmatpush1.msra.mxu0 0.0
    %199 = vmatprep.subr.mxu0 0.0
    %200 = vmatpush1.msra.mxu0 0.0
    %201 = vmatprep.subr.mxu0 0.0
    %202 = vmatpush1.msra.mxu0 0.0
    %203 = vmatprep.subr.mxu0 0.0
    %204 = vmatpush1.msra.mxu0 0.0
    %205 = vmatprep.subr.mxu0 0.0
    %206 = vmatpush1.msra.mxu0 0.0
    %207 = vmatprep.subr.mxu0 0.0
    %208 = vmatpush1.msra.mxu0 0.0
    %209 = vmatprep.subr.mxu0 0.0
    %210 = vmatpush1.msra.mxu0 0.0
    %211 = vmatprep.subr.mxu0 0.0
    %212 = vmatpush1.msra.mxu0 0.0
    %213 = vmatprep.mubr.f32.mxu0 0.0
    %214 = vmatmul.mubr.f32.gmra.mrb[0].mxu0 %v125
    %v215 = vpop.f32.mrb[0].mxu0
    %v216 = vadd.f32 %v147, %v215
    %v217 = vpop.f32.mrb[0].mxu0
    %218 = vdwg.mxu0
    %v219 = vtanh.pop %v216
    %v220 = vld [vmem:[%s5] sm:$0xff]
    %v221 = vld [vmem:[%s5 + $0x8] sm:$0xff]
    %v222 = vld [vmem:[%s5 + $0x10] sm:$0xff]
    %v223 = vld [vmem:[%s5 + $0x18] sm:$0xff]
    %v224 = vld [vmem:[%s5 + $0x20] sm:$0xff]
    %v225 = vld [vmem:[%s5 + $0x28] sm:$0xff]
    %v226 = vld [vmem:[%s5 + $0x30] sm:$0xff]
    %v227 = vld [vmem:[%s5 + $0x38] sm:$0xff]
    %v228 = vld [vmem:[%s5 + $0x40] sm:$0xff]
    %v229 = vld [vmem:[%s5 + $0x48] sm:$0xff]
    %v230 = vld [vmem:[%s5 + $0x50] sm:$0xff]
    %v231 = vld [vmem:[%s5 + $0x58] sm:$0xff]
    %v232 = vld [vmem:[%s5 + $0x60] sm:$0xff]
    %v233 = vld [vmem:[%s5 + $0x68] sm:$0xff]
    %v234 = vld [vmem:[%s5 + $0x70] sm:$0xff]
    %v235 = vld [vmem:[%s5 + $0x78] sm:$0xff]
    %v236 = vld [vmem:[%s6] sm:$0x1]
    %v238 = vlaneseq
    %v239 = vshrl.u32 %v238, 7
    %v240 = vsub.s32 0, %v239
    %v241 = vrot.slane %v236, %v240
    %243 = vmatprep.subr.mxu0 0.0
    %244 = vmatpush1.msra.mxu0 %v220
    %245 = vmatprep.subr.mxu0 0.0
    %246 = vmatpush1.msra.mxu0 %v221
    %247 = vmatprep.subr.mxu0 0.0
    %248 = vmatpush1.msra.mxu0 %v222
    %249 = vmatprep.subr.mxu0 0.0
    %250 = vmatpush1.msra.mxu0 %v223
    %251 = vmatprep.subr.mxu0 0.0
    %252 = vmatpush1.msra.mxu0 %v224
    %253 = vmatprep.subr.mxu0 0.0
    %254 = vmatpush1.msra.mxu0 %v225
    %255 = vmatprep.subr.mxu0 0.0
    %256 = vmatpush1.msra.mxu0 %v226
    %257 = vmatprep.subr.mxu0 0.0
    %258 = vmatpush1.msra.mxu0 %v227
    %259 = vmatprep.subr.mxu0 0.0
    %260 = vmatpush1.msra.mxu0 %v228
    %261 = vmatprep.subr.mxu0 0.0
    %262 = vmatpush1.msra.mxu0 %v229
    %263 = vmatprep.subr.mxu0 0.0
    %264 = vmatpush1.msra.mxu0 %v230
    %265 = vmatprep.subr.mxu0 0.0
    %266 = vmatpush1.msra.mxu0 %v231
    %267 = vmatprep.subr.mxu0 0.0
    %268 = vmatpush1.msra.mxu0 %v232
    %269 = vmatprep.subr.mxu0 0.0
    %270 = vmatpush1.msra.mxu0 %v233
    %271 = vmatprep.subr.mxu0 0.0
    %272 = vmatpush1.msra.mxu0 %v234
    %273 = vmatprep.subr.mxu0 0.0
    %274 = vmatpush1.msra.mxu0 %v235
    %275 = vmatprep.subr.mxu0 0.0
    %276 = vmatpush1.msra.mxu0 0.0
    %277 = vmatprep.subr.mxu0 0.0
    %278 = vmatpush1.msra.mxu0 0.0
    %279 = vmatprep.subr.mxu0 0.0
    %280 = vmatpush1.msra.mxu0 0.0
    %281 = vmatprep.subr.mxu0 0.0
    %282 = vmatpush1.msra.mxu0 0.0
    %283 = vmatprep.subr.mxu0 0.0
    %284 = vmatpush1.msra.mxu0 0.0
    %285 = vmatprep.subr.mxu0 0.0
    %286 = vmatpush1.msra.mxu0 0.0
    %287 = vmatprep.subr.mxu0 0.0
    %288 = vmatpush1.msra.mxu0 0.0
    %289 = vmatprep.subr.mxu0 0.0
    %290 = vmatpush1.msra.mxu0 0.0
    %291 = vmatprep.subr.mxu0 0.0
    %292 = vmatpush1.msra.mxu0 0.0
    %293 = vmatprep.subr.mxu0 0.0
    %294 = vmatpush1.msra.mxu0 0.0
    %295 = vmatprep.subr.mxu0 0.0
    %296 = vmatpush1.msra.mxu0 0.0
    %297 = vmatprep.subr.mxu0 0.0
    %298 = vmatpush1.msra.mxu0 0.0
    %299 = vmatprep.subr.mxu0 0.0
    %300 = vmatpush1.msra.mxu0 0.0
    %301 = vmatprep.subr.mxu0 0.0
    %302 = vmatpush1.msra.mxu0 0.0
    %303 = vmatprep.subr.mxu0 0.0
    %304 = vmatpush1.msra.mxu0 0.0
    %305 = vmatprep.subr.mxu0 0.0
    %306 = vmatpush1.msra.mxu0 0.0
    %307 = vmatprep.mubr.f32.mxu0 0.0
    %308 = vmatmul.mubr.f32.gmra.mrb[0].mxu0 %v219
    %v309 = vpop.f32.mrb[0].mxu0
    %v310 = vadd.f32 %v241, %v309
    %v311 = vpop.f32.mrb[0].mxu0
    %312 = vdwg.mxu0
    %vm313 = vcmp.gt.f32.partialorder %v310, 0.0
    %v314 = vmul.f32 %v310, 0.01
    %v315 = vsel %vm313, %v310, %v314
    %v316 = vld [vmem:[%s7] sm:$0xff]
    %v317 = vld [vmem:[%s7 + $0x8] sm:$0xff]
    %v318 = vld [vmem:[%s7 + $0x10] sm:$0xff]
    %v319 = vld [vmem:[%s7 + $0x18] sm:$0xff]
    %v320 = vld [vmem:[%s7 + $0x20] sm:$0xff]
    %v321 = vld [vmem:[%s7 + $0x28] sm:$0xff]
    %v322 = vld [vmem:[%s7 + $0x30] sm:$0xff]
    %v323 = vld [vmem:[%s7 + $0x38] sm:$0xff]
    %v324 = vld [vmem:[%s8] sm:$0x1]
    %v326 = vlaneseq
    %v327 = vshrl.u32 %v326, 7
    %v328 = vsub.s32 0, %v327
    %v329 = vrot.slane %v324, %v328
    %vm331 = vcmask 523264
    %v333 = vsel %vm331, %v315, 0
    %335 = vmatprep.subr.mxu0 0.0
    %336 = vmatpush1.msra.mxu0 %v316
    %337 = vmatprep.subr.mxu0 0.0
    %338 = vmatpush1.msra.mxu0 %v317
    %339 = vmatprep.subr.mxu0 0.0
    %340 = vmatpush1.msra.mxu0 %v318
    %341 = vmatprep.subr.mxu0 0.0
    %342 = vmatpush1.msra.mxu0 %v319
    %343 = vmatprep.subr.mxu0 0.0
    %344 = vmatpush1.msra.mxu0 %v320
    %345 = vmatprep.subr.mxu0 0.0
    %346 = vmatpush1.msra.mxu0 %v321
    %347 = vmatprep.subr.mxu0 0.0
    %348 = vmatpush1.msra.mxu0 %v322
    %349 = vmatprep.subr.mxu0 0.0
    %350 = vmatpush1.msra.mxu0 %v323
    %351 = vmatprep.subr.mxu0 0.0
    %352 = vmatpush1.msra.mxu0 0.0
    %353 = vmatprep.subr.mxu0 0.0
    %354 = vmatpush1.msra.mxu0 0.0
    %355 = vmatprep.subr.mxu0 0.0
    %356 = vmatpush1.msra.mxu0 0.0
    %357 = vmatprep.subr.mxu0 0.0
    %358 = vmatpush1.msra.mxu0 0.0
    %359 = vmatprep.subr.mxu0 0.0
    %360 = vmatpush1.msra.mxu0 0.0
    %361 = vmatprep.subr.mxu0 0.0
    %362 = vmatpush1.msra.mxu0 0.0
    %363 = vmatprep.subr.mxu0 0.0
    %364 = vmatpush1.msra.mxu0 0.0
    %365 = vmatprep.subr.mxu0 0.0
    %366 = vmatpush1.msra.mxu0 0.0
    %367 = vmatprep.subr.mxu0 0.0
    %368 = vmatpush1.msra.mxu0 0.0
    %369 = vmatprep.subr.mxu0 0.0
    %370 = vmatpush1.msra.mxu0 0.0
    %371 = vmatprep.subr.mxu0 0.0
    %372 = vmatpush1.msra.mxu0 0.0
    %373 = vmatprep.subr.mxu0 0.0
    %374 = vmatpush1.msra.mxu0 0.0
    %375 = vmatprep.subr.mxu0 0.0
    %376 = vmatpush1.msra.mxu0 0.0
    %377 = vmatprep.subr.mxu0 0.0
    %378 = vmatpush1.msra.mxu0 0.0
    %379 = vmatprep.subr.mxu0 0.0
    %380 = vmatpush1.msra.mxu0 0.0
    %381 = vmatprep.subr.mxu0 0.0
    %382 = vmatpush1.msra.mxu0 0.0
    %383 = vmatprep.subr.mxu0 0.0
    %384 = vmatpush1.msra.mxu0 0.0
    %385 = vmatprep.subr.mxu0 0.0
    %386 = vmatpush1.msra.mxu0 0.0
    %387 = vmatprep.subr.mxu0 0.0
    %388 = vmatpush1.msra.mxu0 0.0
    %389 = vmatprep.subr.mxu0 0.0
    %390 = vmatpush1.msra.mxu0 0.0
    %391 = vmatprep.subr.mxu0 0.0
    %392 = vmatpush1.msra.mxu0 0.0
    %393 = vmatprep.subr.mxu0 0.0
    %394 = vmatpush1.msra.mxu0 0.0
    %395 = vmatprep.subr.mxu0 0.0
    %396 = vmatpush1.msra.mxu0 0.0
    %397 = vmatprep.subr.mxu0 0.0
    %398 = vmatpush1.msra.mxu0 0.0
    %399 = vmatprep.mubr.f32.mxu0 0.0
    %400 = vmatmul.mubr.f32.gmra.mrb[0].mxu0 %v333
    %v401 = vpop.f32.mrb[0].mxu0
    %v402 = vadd.f32 %v329, %v401
    %v403 = vpop.f32.mrb[0].mxu0
    %404 = vdwg.mxu0
    %vm405 = vcmp.gt.f32.partialorder %v402, 0.0
    %v406 = vmul.f32 %v402, 0.01
    %v407 = vsel %vm405, %v402, %v406
    %v408 = vld [vmem:[%s9] sm:$0xff]
    %v409 = vld [vmem:[%s9 + $0x8] sm:$0xff]
    %v410 = vld [vmem:[%s10] sm:$0x1]
    %v412 = vlaneseq
    %v413 = vshrl.u32 %v412, 7
    %v414 = vsub.s32 0, %v413
    %v415 = vrot.slane %v410, %v414
    %vm417 = vcmask 130048
    %v419 = vsel %vm417, %v407, 0
    %421 = vmatprep.subr.mxu0 0.0
    %422 = vmatpush1.msra.mxu0 %v408
    %423 = vmatprep.subr.mxu0 0.0
    %424 = vmatpush1.msra.mxu0 %v409
    %425 = vmatprep.subr.mxu0 0.0
    %426 = vmatpush1.msra.mxu0 0.0
    %427 = vmatprep.subr.mxu0 0.0
    %428 = vmatpush1.msra.mxu0 0.0
    %429 = vmatprep.subr.mxu0 0.0
    %430 = vmatpush1.msra.mxu0 0.0
    %431 = vmatprep.subr.mxu0 0.0
    %432 = vmatpush1.msra.mxu0 0.0
    %433 = vmatprep.subr.mxu0 0.0
    %434 = vmatpush1.msra.mxu0 0.0
    %435 = vmatprep.subr.mxu0 0.0
    %436 = vmatpush1.msra.mxu0 0.0
    %437 = vmatprep.subr.mxu0 0.0
    %438 = vmatpush1.msra.mxu0 0.0
    %439 = vmatprep.subr.mxu0 0.0
    %440 = vmatpush1.msra.mxu0 0.0
    %441 = vmatprep.subr.mxu0 0.0
    %442 = vmatpush1.msra.mxu0 0.0
    %443 = vmatprep.subr.mxu0 0.0
    %444 = vmatpush1.msra.mxu0 0.0
    %445 = vmatprep.subr.mxu0 0.0
    %446 = vmatpush1.msra.mxu0 0.0
    %447 = vmatprep.subr.mxu0 0.0
    %448 = vmatpush1.msra.mxu0 0.0
    %449 = vmatprep.subr.mxu0 0.0
    %450 = vmatpush1.msra.mxu0 0.0
    %451 = vmatprep.subr.mxu0 0.0
    %452 = vmatpush1.msra.mxu0 0.0
    %453 = vmatprep.subr.mxu0 0.0
    %454 = vmatpush1.msra.mxu0 0.0
    %455 = vmatprep.subr.mxu0 0.0
    %456 = vmatpush1.msra.mxu0 0.0
    %457 = vmatprep.subr.mxu0 0.0
    %458 = vmatpush1.msra.mxu0 0.0
    %459 = vmatprep.subr.mxu0 0.0
    %460 = vmatpush1.msra.mxu0 0.0
    %461 = vmatprep.subr.mxu0 0.0
    %462 = vmatpush1.msra.mxu0 0.0
    %463 = vmatprep.subr.mxu0 0.0
    %464 = vmatpush1.msra.mxu0 0.0
    %465 = vmatprep.subr.mxu0 0.0
    %466 = vmatpush1.msra.mxu0 0.0
    %467 = vmatprep.subr.mxu0 0.0
    %468 = vmatpush1.msra.mxu0 0.0
    %469 = vmatprep.subr.mxu0 0.0
    %470 = vmatpush1.msra.mxu0 0.0
    %471 = vmatprep.subr.mxu0 0.0
    %472 = vmatpush1.msra.mxu0 0.0
    %473 = vmatprep.subr.mxu0 0.0
    %474 = vmatpush1.msra.mxu0 0.0
    %475 = vmatprep.subr.mxu0 0.0
    %476 = vmatpush1.msra.mxu0 0.0
    %477 = vmatprep.subr.mxu0 0.0
    %478 = vmatpush1.msra.mxu0 0.0
    %479 = vmatprep.subr.mxu0 0.0
    %480 = vmatpush1.msra.mxu0 0.0
    %481 = vmatprep.subr.mxu0 0.0
    %482 = vmatpush1.msra.mxu0 0.0
    %483 = vmatprep.subr.mxu0 0.0
    %484 = vmatpush1.msra.mxu0 0.0
    %485 = vmatprep.mubr.f32.mxu0 0.0
    %486 = vmatmul.mubr.f32.gmra.mrb[0].mxu0 %v419
    %v487 = vpop.f32.mrb[0].mxu0
    %v488 = vadd.f32 %v415, %v487
    %v489 = vpop.f32.mrb[0].mxu0
    %490 = vdwg.mxu0
    %vm491 = vcmask 58368
    %492 = vst.msk [vmem:[#allocation2] sm:$0x3] %vm491, %v488
    // Predicated region
    $region46: #{forward_pallas.1} parent=1 // pred_check
      _
    $region47: #{forward_pallas.1} parent=1 // pred_check_branch
      %494 = sbr.rel (0) target = $region49
    $region48: #{forward_pallas.1} parent=1 // pred_region
      %s496 = ssub.s32 32, 32
      %497 = vsyncadd [#allocation3], %s496
      %s499 = sshll.u32 [#allocation2], 4
      %s500 = int_to_ptr.vmem [resolvable:$true] %s499
      %502 = dma.vmem_to_hbm [thread:$0]  %s500, 32, %s11, [#allocation3]
    $region49: #{forward_pallas.1} parent=1 // pred_fallthru
      _
    // Predicated region
    $region50: #{forward_pallas.1} parent=1 // pred_check
      _
    $region51: #{forward_pallas.1} parent=1 // pred_check_branch
      %504 = sbr.rel (0) target = $region53
    $region52: #{forward_pallas.1} parent=1 // pred_region
      %505 = dma.done [#allocation3], 32
    $region53: #{forward_pallas.1} parent=1 // pred_fallthru
      _
    %506 = vsyncpa [#allocation3], 1

</llo_original>
